<compile_context>
chip_gen: v7x
topology: tpu7x:2x2x1
jax: 0.10.0
libtpu: 0.0.40
codegen_flags: <defaults>
</compile_context>

<pallas_src>
import jax
import jax.numpy as jnp
from jax.experimental import pallas as pl
from jax.experimental.pallas import tpu as pltpu


# ---------------------------------------------------------------------------
# Kernel
# ---------------------------------------------------------------------------
def _sac_critic_kernel(
    x_ref,             # [TB, S+A]   bf16   (state || action_probs)
    w1_ref,            # [S+A, 2*H1] bf16   (fused W1)
    b1_ref,            # [1, 2*H1]   f32
    w2_ref,            # [2*H1, 2*H2] bf16  (block-diagonal)
    b2_ref,            # [1, 2*H2]   f32
    w3_ref,            # [2*H2, 2]   bf16   (block-diagonal)
    b3_ref,            # [1, 2]      f32
    q_ref,             # [TB, 2]     f32    (col 0 = q1, col 1 = q2)
):
    x = x_ref[...]

    # Layer 1 (both nets at once; N = 2*H1 = 256 fills the MXU width).
    h1 = jnp.dot(x, w1_ref[...], preferred_element_type=jnp.float32) + b1_ref[...]
    h1 = jnp.maximum(h1, 0.0)

    # Layer 2 (block-diagonal -> networks stay independent).
    h2 = (
        jnp.dot(h1.astype(jnp.bfloat16), w2_ref[...],
                preferred_element_type=jnp.float32)
        + b2_ref[...]
    )
    h2 = jnp.maximum(h2, 0.0)

    # Layer 3 (block-diagonal, lane-contiguous [TB, 2] output).
    q_ref[...] = (
        jnp.dot(h2.astype(jnp.bfloat16), w3_ref[...],
                preferred_element_type=jnp.float32)
        + b3_ref[...]
    ).astype(q_ref.dtype)


# ---------------------------------------------------------------------------
# Wrapper
# ---------------------------------------------------------------------------
def _round_up(x, m):
    return (x + m - 1) // m * m


def sac_critic_forward(state, action_probs, params, *, block_b=4096):
    """Twin Q-network forward. Returns (q1, q2), each [B, 1] float32."""
    # One DMA stream for layer-1 operand; bf16 halves input HBM traffic.
    x = jnp.concatenate(
        [state.astype(jnp.float32), action_probs.astype(jnp.float32)], axis=1
    ).astype(jnp.bfloat16)

    B, D = x.shape                   # D = state_dim + action_dim
    H1f = params["b1"].shape[1]      # 2 * hidden_layers[0]
    H2f = params["b2"].shape[1]      # 2 * hidden_layers[1]

    # Batch tile: multiple of 8 (sublane constraint), sized so that
    #  - per-grid-step overhead is amortized (big tiles), and
    #  - there are >= 2 grid steps whenever B > 8 (keeps both v7x TCs busy).
    block_b = _round_up(max(block_b, 8), 8)
    if B <= 8:
        TB = B                                   # single full-array tile
    else:
        TB = min(block_b, _round_up(pl.cdiv(B, 2), 8))
    grid = (pl.cdiv(B, TB),)

    def batch_spec(cols):
        return pl.BlockSpec((TB, cols), lambda i: (i, 0))

    def const_spec(arr):
        return pl.BlockSpec(arr.shape, lambda i: (0, 0))

    # Advisory cost hint for XLA scheduling around the custom call.
    flops = 2 * B * (D * H1f + H1f * H2f + H2f * 2)
    bytes_accessed = (
        2 * B * D                                    # x (bf16)
        + 4 * B * 2                                  # q output (f32)
        + 2 * (D * H1f + H1f * H2f + H2f * 2)        # bf16 weights
        + 4 * (H1f + H2f + 2)                        # f32 biases
    )
    cost = pl.CostEstimate(flops=flops, transcendentals=0,
                           bytes_accessed=bytes_accessed)

    q = pl.pallas_call(
        _sac_critic_kernel,
        out_shape=jax.ShapeDtypeStruct((B, 2), jnp.float32),
        grid=grid,
        in_specs=[
            batch_spec(D),                 # x = state || action_probs
            const_spec(params["w1"]),
            const_spec(params["b1"]),
            const_spec(params["w2"]),
            const_spec(params["b2"]),
            const_spec(params["w3"]),
            const_spec(params["b3"]),
        ],
        out_specs=pl.BlockSpec((TB, 2), lambda i: (i, 0)),
        compiler_params=pltpu.CompilerParams(
            dimension_semantics=("parallel",)),
        cost_estimate=cost,
    )(
        x,
        params["w1"], params["b1"],
        params["w2"], params["b2"],
        params["w3"], params["b3"],
    )

    return q[:, 0:1], q[:, 1:2]


def sac_critic_q1(state, action_probs, params, *, block_b=4096):
    """Equivalent of SACCritic.q1 (first network only)."""
    q1, _ = sac_critic_forward(state, action_probs, params, block_b=block_b)
    return q1


# ---------------------------------------------------------------------------
# Parameter construction (PyTorch nn.Linear default init, then fused packing)
# ---------------------------------------------------------------------------
def _pack_params(q1_layers, q2_layers):
    (w1a, b1a), (w2a, b2a), (w3a, b3a) = q1_layers
    (w1b, b1b), (w2b, b2b), (w3b, b3b) = q2_layers
    h1 = w1a.shape[1]
    h2 = w2a.shape[1]

    w1f = jnp.concatenate([w1a, w1b], axis=1)                 # [D, 2*h1]
    b1f = jnp.concatenate([b1a, b1b], axis=1)                 # [1, 2*h1]

    w2f = jnp.zeros((2 * h1, 2 * h2), jnp.float32)
    w2f = w2f.at[:h1, :h2].set(w2a).at[h1:, h2:].set(w2b)     # blockdiag
    b2f = jnp.concatenate([b2a, b2b], axis=1)                 # [1, 2*h2]

    w3f = jnp.zeros((2 * h2, 2), jnp.float32)
    w3f = w3f.at[:h2, 0:1].set(w3a).at[h2:, 1:2].set(w3b)     # blockdiag-ish
    b3f = jnp.concatenate([b3a, b3b], axis=1)                 # [1, 2]

    return {
        # bf16 matmul operands (MXU-native rate); biases stay f32.
        "w1": w1f.astype(jnp.bfloat16), "b1": b1f,
        "w2": w2f.astype(jnp.bfloat16), "b2": b2f,
        "w3": w3f.astype(jnp.bfloat16), "b3": b3f,
        "_raw_q1": q1_layers, "_raw_q2": q2_layers,
    }


def init_sac_critic_params(key, state_dim, action_dim, hidden_layers=(128, 64)):
    """Init matching nn.Linear default (U[-1/sqrt(fan_in), +1/sqrt(fan_in)])."""
    in_dim = state_dim + action_dim
    dims = [in_dim, hidden_layers[0], hidden_layers[1], 1]

    def make_net(key):
        layers = []
        for i in range(3):
            key, kw, kb = jax.random.split(key, 3)
            fan_in, fan_out = dims[i], dims[i + 1]
            bound = 1.0 / (fan_in ** 0.5)
            w = jax.random.uniform(kw, (fan_in, fan_out), jnp.float32,
                                   minval=-bound, maxval=bound)
            b = jax.random.uniform(kb, (1, fan_out), jnp.float32,
                                   minval=-bound, maxval=bound)
            layers.append((w, b))
        return layers, key

    q1_layers, key = make_net(key)
    q2_layers, _ = make_net(key)
    return _pack_params(q1_layers, q2_layers)


# ---------------------------------------------------------------------------
# Pure-JAX reference (uses the original, unfused per-network f32 weights)
# ---------------------------------------------------------------------------
def _reference_forward(state, action_probs, params):
    x = jnp.concatenate([state, action_probs], axis=1).astype(jnp.float32)

    def mlp(layers):
        (w1, b1), (w2, b2), (w3, b3) = layers
        h1 = jnp.maximum(x @ w1 + b1, 0.0)
        h2 = jnp.maximum(h1 @ w2 + b2, 0.0)
        return h2 @ w3 + b3

    return mlp(params["_raw_q1"]), mlp(params["_raw_q2"])


# ---------------------------------------------------------------------------
# Demo / correctness check
# ---------------------------------------------------------------------------
if __name__ == "__main__":
    state_dim = 16
    action_dim = 4
    hidden_layers = (128, 64)

    key = jax.random.PRNGKey(0)
    k_params, k_state, k_action = jax.random.split(key, 3)
    params = init_sac_critic_params(k_params, state_dim, action_dim, hidden_layers)

    # bf16 matmul operands -> ~1e-2 relative vs the f32 reference.
    ATOL = 5e-2
    RTOL = 5e-2

    # Case 1: small batch, single grid step (B <= 8 -> full-array tile).
    batch = 8
    state = jax.random.normal(k_state, (batch, state_dim), jnp.float32)
    action_logits = jax.random.normal(k_action, (batch, action_dim), jnp.float32)
    action_probs = jax.nn.softmax(action_logits, axis=-1)

    q1, q2 = sac_critic_forward(state, action_probs, params)
    q1 = jax.block_until_ready(q1)
    q2 = jax.block_until_ready(q2)

    q1_ref, q2_ref = _reference_forward(state, action_probs, params)
    assert q1.shape == (batch, 1) and q2.shape == (batch, 1)
    assert jnp.allclose(q1, q1_ref, atol=ATOL, rtol=RTOL), "q1 mismatch (single tile)"
    assert jnp.allclose(q2, q2_ref, atol=ATOL, rtol=RTOL), "q2 mismatch (single tile)"

    # Case 2: exercise the batch grid (>=2 tiles, partial last tile, resident
    # weights across grid steps).
    batch2 = 24
    k_s2, k_a2 = jax.random.split(jax.random.PRNGKey(1))
    state2 = jax.random.normal(k_s2, (batch2, state_dim), jnp.float32)
    action2 = jax.nn.softmax(
        jax.random.normal(k_a2, (batch2, action_dim), jnp.float32), axis=-1)

    q1b, q2b = sac_critic_forward(state2, action2, params)
    q1b = jax.block_until_ready(q1b)
    q2b = jax.block_until_ready(q2b)

    q1b_ref, q2b_ref = _reference_forward(state2, action2, params)
    assert jnp.allclose(q1b, q1b_ref, atol=ATOL, rtol=RTOL), "q1 mismatch (gridded)"
    assert jnp.allclose(q2b, q2b_ref, atol=ATOL, rtol=RTOL), "q2 mismatch (gridded)"

    # Case 3: q1-only helper (matches SACCritic.q1).
    q1_only = jax.block_until_ready(sac_critic_q1(state, action_probs, params))
    assert jnp.allclose(q1_only, q1_ref, atol=ATOL, rtol=RTOL), "q1-only mismatch"

    print("KERNEL_OK")
</pallas_src>

<mosaic_0001>
module attributes {stable_mosaic.version = 11 : i64} {
  func.func @_sac_critic_kernel(%arg0: i32, %arg1: memref<8x20xbf16, #tpu.memory_space<vmem>>, %arg2: memref<20x256xbf16, #tpu.memory_space<vmem>>, %arg3: memref<1x256xf32, #tpu.memory_space<vmem>>, %arg4: memref<256x128xbf16, #tpu.memory_space<vmem>>, %arg5: memref<1x128xf32, #tpu.memory_space<vmem>>, %arg6: memref<128x2xbf16, #tpu.memory_space<vmem>>, %arg7: memref<1x2xf32, #tpu.memory_space<vmem>>, %arg8: memref<8x2xf32, #tpu.memory_space<vmem>>) attributes {dimension_semantics = [#tpu.dimension_semantics<parallel>], iteration_bounds = array<i64: 1>, scalar_prefetch = 0 : i64, scratch_operands = 0 : i64, tpu.core_type = #tpu.core_type<tc>, window_params = [{transform_indices = @transform_0, window_bounds = array<i64: 8, 20>}, {pipeline_mode = #tpu.pipeline_mode<synchronous>, transform_indices = @transform_1, window_bounds = array<i64: 20, 256>}, {pipeline_mode = #tpu.pipeline_mode<synchronous>, transform_indices = @transform_2, window_bounds = array<i64: 1, 256>}, {pipeline_mode = #tpu.pipeline_mode<synchronous>, transform_indices = @transform_3, window_bounds = array<i64: 256, 128>}, {pipeline_mode = #tpu.pipeline_mode<synchronous>, transform_indices = @transform_4, window_bounds = array<i64: 1, 128>}, {pipeline_mode = #tpu.pipeline_mode<synchronous>, transform_indices = @transform_5, window_bounds = array<i64: 128, 2>}, {pipeline_mode = #tpu.pipeline_mode<synchronous>, transform_indices = @transform_6, window_bounds = array<i64: 1, 2>}, {transform_indices = @transform_7, window_bounds = array<i64: 8, 2>}]} {
    %c0 = arith.constant 0 : index
    %c0_0 = arith.constant 0 : index
    %0 = vector.load %arg1[%c0, %c0_0] : memref<8x20xbf16, #tpu.memory_space<vmem>>, vector<8x20xbf16>
    %c0_1 = arith.constant 0 : index
    %c0_2 = arith.constant 0 : index
    %1 = vector.load %arg2[%c0_1, %c0_2] : memref<20x256xbf16, #tpu.memory_space<vmem>>, vector<20x256xbf16>
    %cst = arith.constant dense<0.000000e+00> : vector<8x256xf32>
    %2 = tpu.matmul %0, %1, %cst {dimension_numbers = #tpu.dot_dimension_numbers<[1], [0], [0], [1], [0, 0, 1, 1], [], []>} : vector<8x20xbf16>, vector<20x256xbf16>, vector<8x256xf32> -> vector<8x256xf32>
    %c0_3 = arith.constant 0 : index
    %c0_4 = arith.constant 0 : index
    %3 = vector.load %arg3[%c0_3, %c0_4] : memref<1x256xf32, #tpu.memory_space<vmem>>, vector<1x256xf32>
    %4 = vector.broadcast %3 : vector<1x256xf32> to vector<8x256xf32>
    %5 = arith.addf %2, %4 : vector<8x256xf32>
    %cst_5 = arith.constant 0.000000e+00 : f32
    %6 = vector.broadcast %cst_5 : f32 to vector<8x256xf32>
    %7 = arith.maximumf %5, %6 : vector<8x256xf32>
    %8 = arith.truncf %7 : vector<8x256xf32> to vector<8x256xbf16>
    %c0_6 = arith.constant 0 : index
    %c0_7 = arith.constant 0 : index
    %9 = vector.load %arg4[%c0_6, %c0_7] : memref<256x128xbf16, #tpu.memory_space<vmem>>, vector<256x128xbf16>
    %cst_8 = arith.constant dense<0.000000e+00> : vector<8x128xf32>
    %10 = tpu.matmul %8, %9, %cst_8 {dimension_numbers = #tpu.dot_dimension_numbers<[1], [0], [0], [1], [0, 0, 1, 1], [], []>} : vector<8x256xbf16>, vector<256x128xbf16>, vector<8x128xf32> -> vector<8x128xf32>
    %c0_9 = arith.constant 0 : index
    %c0_10 = arith.constant 0 : index
    %11 = vector.load %arg5[%c0_9, %c0_10] : memref<1x128xf32, #tpu.memory_space<vmem>>, vector<1x128xf32>
    %12 = vector.broadcast %11 : vector<1x128xf32> to vector<8x128xf32>
    %13 = arith.addf %10, %12 : vector<8x128xf32>
    %cst_11 = arith.constant 0.000000e+00 : f32
    %14 = vector.broadcast %cst_11 : f32 to vector<8x128xf32>
    %15 = arith.maximumf %13, %14 : vector<8x128xf32>
    %16 = arith.truncf %15 : vector<8x128xf32> to vector<8x128xbf16>
    %c0_12 = arith.constant 0 : index
    %c0_13 = arith.constant 0 : index
    %17 = vector.load %arg6[%c0_12, %c0_13] : memref<128x2xbf16, #tpu.memory_space<vmem>>, vector<128x2xbf16>
    %cst_14 = arith.constant dense<0.000000e+00> : vector<8x2xf32>
    %18 = tpu.matmul %16, %17, %cst_14 {dimension_numbers = #tpu.dot_dimension_numbers<[1], [0], [0], [1], [0, 0, 1, 1], [], []>} : vector<8x128xbf16>, vector<128x2xbf16>, vector<8x2xf32> -> vector<8x2xf32>
    %c0_15 = arith.constant 0 : index
    %c0_16 = arith.constant 0 : index
    %19 = vector.load %arg7[%c0_15, %c0_16] : memref<1x2xf32, #tpu.memory_space<vmem>>, vector<1x2xf32>
    %20 = vector.broadcast %19 : vector<1x2xf32> to vector<8x2xf32>
    %21 = arith.addf %18, %20 : vector<8x2xf32>
    %c0_17 = arith.constant 0 : index
    %c0_18 = arith.constant 0 : index
    %22 = vector.load %arg8[%c0_17, %c0_18] : memref<8x2xf32, #tpu.memory_space<vmem>>, vector<8x2xf32>
    tpu.vector_store %arg8[%c0_17, %c0_18], %21 {strides = array<i32>} : memref<8x2xf32, #tpu.memory_space<vmem>>, vector<8x2xf32>,
    return
  }
  func.func @transform_0(%arg0: i32) -> (i32, i32) {
    %c0_i32 = arith.constant 0 : i32
    %c0_i32_0 = arith.constant 0 : i32
    return %arg0, %c0_i32 : i32, i32
  }
  func.func @transform_1(%arg0: i32) -> (i32, i32) {
    %c0_i32 = arith.constant 0 : i32
    %c0_i32_0 = arith.constant 0 : i32
    %c0_i32_1 = arith.constant 0 : i32
    return %c0_i32, %c0_i32_0 : i32, i32
  }
  func.func @transform_2(%arg0: i32) -> (i32, i32) {
    %c0_i32 = arith.constant 0 : i32
    %c0_i32_0 = arith.constant 0 : i32
    %c0_i32_1 = arith.constant 0 : i32
    return %c0_i32, %c0_i32_0 : i32, i32
  }
  func.func @transform_3(%arg0: i32) -> (i32, i32) {
    %c0_i32 = arith.constant 0 : i32
    %c0_i32_0 = arith.constant 0 : i32
    %c0_i32_1 = arith.constant 0 : i32
    return %c0_i32, %c0_i32_0 : i32, i32
  }
  func.func @transform_4(%arg0: i32) -> (i32, i32) {
    %c0_i32 = arith.constant 0 : i32
    %c0_i32_0 = arith.constant 0 : i32
    %c0_i32_1 = arith.constant 0 : i32
    return %c0_i32, %c0_i32_0 : i32, i32
  }
  func.func @transform_5(%arg0: i32) -> (i32, i32) {
    %c0_i32 = arith.constant 0 : i32
    %c0_i32_0 = arith.constant 0 : i32
    %c0_i32_1 = arith.constant 0 : i32
    return %c0_i32, %c0_i32_0 : i32, i32
  }
  func.func @transform_6(%arg0: i32) -> (i32, i32) {
    %c0_i32 = arith.constant 0 : i32
    %c0_i32_0 = arith.constant 0 : i32
    %c0_i32_1 = arith.constant 0 : i32
    return %c0_i32, %c0_i32_0 : i32, i32
  }
  func.func @transform_7(%arg0: i32) -> (i32, i32) {
    %c0_i32 = arith.constant 0 : i32
    %c0_i32_0 = arith.constant 0 : i32
    return %arg0, %c0_i32 : i32, i32
  }
}

</mosaic_0001>

<llo_original>
// kernel: tpu_custom_call.1
$region0: #{tpu_custom_call.1}
  #allocation0 [shape = 'u32[]', space=smem, size = 0x4, offset = 0x4, fixed_abs, tag = 'smem constant byte address 0x4 - core index']
  #allocation1 [shape = 'u32[144,128]{1,0:T(1,128)}', space=vmem, size = 0x12000, scoped, tag = 'internal scratch']
  %s0 = inlined_call_operand.vmem [shape: bf16[8,20], index: 0, kind: input, shape index: {}]
  %s1 = inlined_call_operand.vmem [shape: bf16[20,256], index: 1, kind: input, shape index: {}]
  %s2 = inlined_call_operand.vmem [shape: f32[1,256], index: 2, kind: input, shape index: {}]
  %s3 = inlined_call_operand.hbm [shape: bf16[256,128], index: 3, kind: input, shape index: {}]
  %s4 = inlined_call_operand.vmem [shape: f32[1,128], index: 4, kind: input, shape index: {}]
  %s5 = inlined_call_operand.vmem [shape: bf16[128,2], index: 5, kind: input, shape index: {}]
  %s6 = inlined_call_operand.vmem [shape: f32[1,2], index: 6, kind: input, shape index: {}]
  %s7 = inlined_call_operand.vmem [shape: f32[8,2], index: 7, kind: output, shape index: {}]
  %s8 = sld [smem:[#allocation0]]
  $region42: #{tpu_custom_call.1} parent=0
    _
  %s10 = ssub.s32 1, %s8
  %s11 = scalar_select 0, %s10, %s8
  $region1: #{tpu_custom_call.1} parent=0
    #allocation2 [shape = 'u8[65536]{0}', space=vmem, size = 0x10000, scoped, tag = 'input window, operand 3, single buffered']
    #allocation3 [shape = 's32[1]{0}', space=sflag, size = 0x4, scoped, tag = 'scoped memory for tpu_custom_call.1']
    %12 = vsyncpa [#allocation3], 0
    // Predicated region
    $region2: #{tpu_custom_call.1} parent=1 // pred_check
      _
    $region3: #{tpu_custom_call.1} parent=1 // pred_check_branch
      %14 = sbr.rel (0) target = $region5
    $region4: #{tpu_custom_call.1} parent=1 // pred_region
      _
    $region5: #{tpu_custom_call.1} parent=1 // pred_fallthru
      _
    // Predicated region
    $region6: #{tpu_custom_call.1} parent=1 // pred_check
      _
    $region7: #{tpu_custom_call.1} parent=1 // pred_check_branch
      %16 = sbr.rel (0) target = $region9
    $region8: #{tpu_custom_call.1} parent=1 // pred_region
      _
    $region9: #{tpu_custom_call.1} parent=1 // pred_fallthru
      _
    // Predicated region
    $region10: #{tpu_custom_call.1} parent=1 // pred_check
      _
    $region11: #{tpu_custom_call.1} parent=1 // pred_check_branch
      %18 = sbr.rel (0) target = $region13
    $region12: #{tpu_custom_call.1} parent=1 // pred_region
      _
    $region13: #{tpu_custom_call.1} parent=1 // pred_fallthru
      _
    // Predicated region
    $region14: #{tpu_custom_call.1} parent=1 // pred_check
      _
    $region15: #{tpu_custom_call.1} parent=1 // pred_check_branch
      %20 = sbr.rel (0) target = $region17
    $region16: #{tpu_custom_call.1} parent=1 // pred_region
      %s22 = ssub.s32 2048, 2048
      %23 = vsyncadd [#allocation3], %s22
      %s24 = sshll.u32 [#allocation2], 4
      %s25 = int_to_ptr.vmem [resolvable:$true] %s24
      %30 = dma.hbm_to_vmem [thread:$0]  %s3, 2048, %s25, [#allocation3], 64, 64, 4
    $region17: #{tpu_custom_call.1} parent=1 // pred_fallthru
      _
    // Predicated region
    $region18: #{tpu_custom_call.1} parent=1 // pred_check
      _
    $region19: #{tpu_custom_call.1} parent=1 // pred_check_branch
      %32 = sbr.rel (0) target = $region21
    $region20: #{tpu_custom_call.1} parent=1 // pred_region
      _
    $region21: #{tpu_custom_call.1} parent=1 // pred_fallthru
      _
    // Predicated region
    $region22: #{tpu_custom_call.1} parent=1 // pred_check
      _
    $region23: #{tpu_custom_call.1} parent=1 // pred_check_branch
      %34 = sbr.rel (0) target = $region25
    $region24: #{tpu_custom_call.1} parent=1 // pred_region
      _
    $region25: #{tpu_custom_call.1} parent=1 // pred_fallthru
      _
    // Predicated region
    $region26: #{tpu_custom_call.1} parent=1 // pred_check
      _
    $region27: #{tpu_custom_call.1} parent=1 // pred_check_branch
      %36 = sbr.rel (0) target = $region29
    $region28: #{tpu_custom_call.1} parent=1 // pred_region
      _
    $region29: #{tpu_custom_call.1} parent=1 // pred_fallthru
      _
    // Predicated region
    $region30: #{tpu_custom_call.1} parent=1 // pred_check
      _
    $region31: #{tpu_custom_call.1} parent=1 // pred_check_branch
      %38 = sbr.rel (0) target = $region33
    $region32: #{tpu_custom_call.1} parent=1 // pred_region
      %39 = dma.done [#allocation3], 2048
    $region33: #{tpu_custom_call.1} parent=1 // pred_fallthru
      _
    %v41 = vld [vmem:[%s0] sm:$0xf]
    %v42 = vld [vmem:[%s1] sm:$0xff]
    %v43 = vld [vmem:[%s1 + $0x8] sm:$0xff]
    %v44 = vld [vmem:[%s1 + $0x10] sm:$0x33]
    %v45 = vld [vmem:[%s2] sm:$0x3]
    %v47 = vlaneseq
    %v48 = vshrl.u32 %v47, 7
    %v49 = vsub.s32 0, %v48
    %v50 = vrot.slane %v45, %v49
    %v51 = vlaneseq
    %v52 = vshrl.u32 %v51, 7
    %v53 = vsub.s32 1, %v52
    %v54 = vrot.slane %v45, %v53
    %v60 = vunpack.c.l.b16 %v42
    %v61 = vunpack.c.h.b16 %v42
    %v62 = vunpack.c.l.b16 %v43
    %v63 = vunpack.c.h.b16 %v43
    %v64 = vunpack.c.l.b16 %v44
    %v65 = vunpack.c.h.b16 %v44
    %v66 = vpack.c.b16 %v62, %v60
    %v67 = vpack.c.b16 %v63, %v61
    %v68 = vpack.c.b16 %v64, %v64
    %v69 = vpack.c.b16 %v65, %v65
    %vm72 = vcmask 162816
    %v74 = vsel %vm72, %v41, 0
    %vm76 = vcmask 1041408
    %v78 = vsel %vm76, %v68, 0
    %v81 = vsel %vm76, %v69, 0
    %83 = vmatprep.subr.bf16.mxu0 %v67
    %84 = vmatpush1.bf16.msra.mxu0 %v66
    %85 = vmatprep.subr.bf16.mxu0 %v81
    %86 = vmatpush1.bf16.msra.mxu0 %v78
    %87 = vmatprep.subr.bf16.mxu0 0
    %88 = vmatpush1.bf16.msra.mxu0 0
    %89 = vmatprep.subr.bf16.mxu0 0
    %90 = vmatpush1.bf16.msra.mxu0 0
    %91 = vmatprep.subr.bf16.mxu0 0
    %92 = vmatpush1.bf16.msra.mxu0 0
    %93 = vmatprep.subr.bf16.mxu0 0
    %94 = vmatpush1.bf16.msra.mxu0 0
    %95 = vmatprep.subr.bf16.mxu0 0
    %96 = vmatpush1.bf16.msra.mxu0 0
    %97 = vmatprep.subr.bf16.mxu0 0
    %98 = vmatpush1.bf16.msra.mxu0 0
    %99 = vmatprep.subr.bf16.mxu0 0
    %100 = vmatpush1.bf16.msra.mxu0 0
    %101 = vmatprep.subr.bf16.mxu0 0
    %102 = vmatpush1.bf16.msra.mxu0 0
    %103 = vmatprep.subr.bf16.mxu0 0
    %104 = vmatpush1.bf16.msra.mxu0 0
    %105 = vmatprep.subr.bf16.mxu0 0
    %106 = vmatpush1.bf16.msra.mxu0 0
    %107 = vmatprep.subr.bf16.mxu0 0
    %108 = vmatpush1.bf16.msra.mxu0 0
    %109 = vmatprep.subr.bf16.mxu0 0
    %110 = vmatpush1.bf16.msra.mxu0 0
    %111 = vmatprep.subr.bf16.mxu0 0
    %112 = vmatpush1.bf16.msra.mxu0 0
    %113 = vmatprep.subr.bf16.mxu0 0
    %114 = vmatpush1.bf16.msra.mxu0 0
    %115 = vmatprep.mubr.bf16.mxu0 0
    %116 = vmatmul.mubr.bf16.gmra.mrb[0].mxu0 %v74
    %v117 = vpop.f32.mrb[0].mxu0
    %v118 = vadd.f32 %v50, %v117
    %v119 = vpop.f32.mrb[0].mxu0
    %v120 = vadd.f32 %v54, %v119
    %v121 = vpop.f32.mrb[0].mxu0
    %v122 = vpop.f32.mrb[0].mxu0
    %123 = vdwg.mxu0
    %v124 = vmax.f32 %v118, 0.0
    %v125 = vmax.f32 %v120, 0.0
    %v126 = vpack.c.bf16 %v124, %v124
    %v127 = vpack.c.bf16 %v125, %v125
    %v128 = vld [vmem:[#allocation2] sm:$0xf]
    %v129 = vld [vmem:[#allocation2 + $0x4] sm:$0xf]
    %v130 = vld [vmem:[#allocation2 + $0x8] sm:$0xf]
    %v131 = vld [vmem:[#allocation2 + $0xc] sm:$0xf]
    %v132 = vld [vmem:[#allocation2 + $0x10] sm:$0xf]
    %v133 = vld [vmem:[#allocation2 + $0x14] sm:$0xf]
    %v134 = vld [vmem:[#allocation2 + $0x18] sm:$0xf]
    %v135 = vld [vmem:[#allocation2 + $0x1c] sm:$0xf]
    %v136 = vld [vmem:[#allocation2 + $0x20] sm:$0xf]
    %v137 = vld [vmem:[#allocation2 + $0x24] sm:$0xf]
    %v138 = vld [vmem:[#allocation2 + $0x28] sm:$0xf]
    %v139 = vld [vmem:[#allocation2 + $0x2c] sm:$0xf]
    %v140 = vld [vmem:[#allocation2 + $0x30] sm:$0xf]
    %v141 = vld [vmem:[#allocation2 + $0x34] sm:$0xf]
    %v142 = vld [vmem:[#allocation2 + $0x38] sm:$0xf]
    %v143 = vld [vmem:[#allocation2 + $0x3c] sm:$0xf]
    %v144 = vld [vmem:[#allocation2 + $0x40] sm:$0xf]
    %v145 = vld [vmem:[#allocation2 + $0x44] sm:$0xf]
    %v146 = vld [vmem:[#allocation2 + $0x48] sm:$0xf]
    %v147 = vld [vmem:[#allocation2 + $0x4c] sm:$0xf]
    %v148 = vld [vmem:[#allocation2 + $0x50] sm:$0xf]
    %v149 = vld [vmem:[#allocation2 + $0x54] sm:$0xf]
    %v150 = vld [vmem:[#allocation2 + $0x58] sm:$0xf]
    %v151 = vld [vmem:[#allocation2 + $0x5c] sm:$0xf]
    %v152 = vld [vmem:[#allocation2 + $0x60] sm:$0xf]
    %v153 = vld [vmem:[#allocation2 + $0x64] sm:$0xf]
    %v154 = vld [vmem:[#allocation2 + $0x68] sm:$0xf]
    %v155 = vld [vmem:[#allocation2 + $0x6c] sm:$0xf]
    %v156 = vld [vmem:[#allocation2 + $0x70] sm:$0xf]
    %v157 = vld [vmem:[#allocation2 + $0x74] sm:$0xf]
    %v158 = vld [vmem:[#allocation2 + $0x78] sm:$0xf]
    %v159 = vld [vmem:[#allocation2 + $0x7c] sm:$0xf]
    %v160 = vld [vmem:[%s4] sm:$0x1]
    %v162 = vlaneseq
    %v163 = vshrl.u32 %v162, 7
    %v164 = vsub.s32 0, %v163
    %v165 = vrot.slane %v160, %v164
    %v199 = vunpack.c.l.b16 %v128
    %v200 = vunpack.c.l.b16 %v129
    %v201 = vunpack.c.l.b16 %v130
    %v202 = vunpack.c.l.b16 %v131
    %v203 = vunpack.c.l.b16 %v132
    %v204 = vunpack.c.l.b16 %v133
    %v205 = vunpack.c.l.b16 %v134
    %v206 = vunpack.c.l.b16 %v135
    %v207 = vunpack.c.l.b16 %v136
    %v208 = vunpack.c.l.b16 %v137
    %v209 = vunpack.c.l.b16 %v138
    %v210 = vunpack.c.l.b16 %v139
    %v211 = vunpack.c.l.b16 %v140
    %v212 = vunpack.c.l.b16 %v141
    %v213 = vunpack.c.l.b16 %v142
    %v214 = vunpack.c.l.b16 %v143
    %v215 = vunpack.c.l.b16 %v144
    %v216 = vunpack.c.l.b16 %v145
    %v217 = vunpack.c.l.b16 %v146
    %v218 = vunpack.c.l.b16 %v147
    %v219 = vunpack.c.l.b16 %v148
    %v220 = vunpack.c.l.b16 %v149
    %v221 = vunpack.c.l.b16 %v150
    %v222 = vunpack.c.l.b16 %v151
    %v223 = vunpack.c.l.b16 %v152
    %v224 = vunpack.c.l.b16 %v153
    %v225 = vunpack.c.l.b16 %v154
    %v226 = vunpack.c.l.b16 %v155
    %v227 = vunpack.c.l.b16 %v156
    %v228 = vunpack.c.l.b16 %v157
    %v229 = vunpack.c.l.b16 %v158
    %v230 = vunpack.c.l.b16 %v159
    %v231 = vpack.c.b16 %v200, %v199
    %v232 = vpack.c.b16 %v202, %v201
    %v233 = vpack.c.b16 %v204, %v203
    %v234 = vpack.c.b16 %v206, %v205
    %v235 = vpack.c.b16 %v208, %v207
    %v236 = vpack.c.b16 %v210, %v209
    %v237 = vpack.c.b16 %v212, %v211
    %v238 = vpack.c.b16 %v214, %v213
    %v239 = vpack.c.b16 %v216, %v215
    %v240 = vpack.c.b16 %v218, %v217
    %v241 = vpack.c.b16 %v220, %v219
    %v242 = vpack.c.b16 %v222, %v221
    %v243 = vpack.c.b16 %v224, %v223
    %v244 = vpack.c.b16 %v226, %v225
    %v245 = vpack.c.b16 %v228, %v227
    %v246 = vpack.c.b16 %v230, %v229
    %263 = vmatprep.subr.bf16.mxu0 0
    %264 = vmatpush1.bf16.msra.mxu0 %v231
    %265 = vmatprep.subr.bf16.mxu0 0
    %266 = vmatpush1.bf16.msra.mxu0 %v232
    %267 = vmatprep.subr.bf16.mxu0 0
    %268 = vmatpush1.bf16.msra.mxu0 %v233
    %269 = vmatprep.subr.bf16.mxu0 0
    %270 = vmatpush1.bf16.msra.mxu0 %v234
    %271 = vmatprep.subr.bf16.mxu0 0
    %272 = vmatpush1.bf16.msra.mxu0 %v235
    %273 = vmatprep.subr.bf16.mxu0 0
    %274 = vmatpush1.bf16.msra.mxu0 %v236
    %275 = vmatprep.subr.bf16.mxu0 0
    %276 = vmatpush1.bf16.msra.mxu0 %v237
    %277 = vmatprep.subr.bf16.mxu0 0
    %278 = vmatpush1.bf16.msra.mxu0 %v238
    %279 = vmatprep.subr.bf16.mxu0 0
    %280 = vmatpush1.bf16.msra.mxu0 %v239
    %281 = vmatprep.subr.bf16.mxu0 0
    %282 = vmatpush1.bf16.msra.mxu0 %v240
    %283 = vmatprep.subr.bf16.mxu0 0
    %284 = vmatpush1.bf16.msra.mxu0 %v241
    %285 = vmatprep.subr.bf16.mxu0 0
    %286 = vmatpush1.bf16.msra.mxu0 %v242
    %287 = vmatprep.subr.bf16.mxu0 0
    %288 = vmatpush1.bf16.msra.mxu0 %v243
    %289 = vmatprep.subr.bf16.mxu0 0
    %290 = vmatpush1.bf16.msra.mxu0 %v244
    %291 = vmatprep.subr.bf16.mxu0 0
    %292 = vmatpush1.bf16.msra.mxu0 %v245
    %293 = vmatprep.subr.bf16.mxu0 0
    %294 = vmatpush1.bf16.msra.mxu0 %v246
    %295 = vmatprep.mubr.bf16.mxu0 %v127
    %296 = vmatmul.mubr.bf16.gmra.mrb[0].mxu0 %v126
    %v297 = vpop.f32.mrb[0].mxu0
    %v298 = vadd.f32 %v165, %v297
    %v299 = vpop.f32.mrb[0].mxu0
    %v300 = vpop.f32.mrb[0].mxu0
    %v301 = vpop.f32.mrb[0].mxu0
    %302 = vdwg.mxu0
    %v303 = vmax.f32 %v298, 0.0
    %v304 = vpack.c.bf16 %v303, %v303
    %v305 = vld [vmem:[%s5] sm:$0xf]
    %v306 = vld [vmem:[%s5 + $0x4] sm:$0xf]
    %v307 = vld [vmem:[%s5 + $0x8] sm:$0xf]
    %v308 = vld [vmem:[%s5 + $0xc] sm:$0xf]
    %v309 = vld [vmem:[%s5 + $0x10] sm:$0xf]
    %v310 = vld [vmem:[%s5 + $0x14] sm:$0xf]
    %v311 = vld [vmem:[%s5 + $0x18] sm:$0xf]
    %v312 = vld [vmem:[%s5 + $0x1c] sm:$0xf]
    %v313 = vld [vmem:[%s5 + $0x20] sm:$0xf]
    %v314 = vld [vmem:[%s5 + $0x24] sm:$0xf]
    %v315 = vld [vmem:[%s5 + $0x28] sm:$0xf]
    %v316 = vld [vmem:[%s5 + $0x2c] sm:$0xf]
    %v317 = vld [vmem:[%s5 + $0x30] sm:$0xf]
    %v318 = vld [vmem:[%s5 + $0x34] sm:$0xf]
    %v319 = vld [vmem:[%s5 + $0x38] sm:$0xf]
    %v320 = vld [vmem:[%s5 + $0x3c] sm:$0xf]
    %v321 = vld [vmem:[%s6] sm:$0x1]
    %v323 = vlaneseq
    %v324 = vshrl.u32 %v323, 7
    %v325 = vsub.s32 0, %v324
    %v326 = vrot.slane %v321, %v325
    %v344 = vunpack.c.l.b16 %v305
    %v345 = vunpack.c.l.b16 %v306
    %v346 = vunpack.c.l.b16 %v307
    %v347 = vunpack.c.l.b16 %v308
    %v348 = vunpack.c.l.b16 %v309
    %v349 = vunpack.c.l.b16 %v310
    %v350 = vunpack.c.l.b16 %v311
    %v351 = vunpack.c.l.b16 %v312
    %v352 = vunpack.c.l.b16 %v313
    %v353 = vunpack.c.l.b16 %v314
    %v354 = vunpack.c.l.b16 %v315
    %v355 = vunpack.c.l.b16 %v316
    %v356 = vunpack.c.l.b16 %v317
    %v357 = vunpack.c.l.b16 %v318
    %v358 = vunpack.c.l.b16 %v319
    %v359 = vunpack.c.l.b16 %v320
    %v360 = vpack.c.b16 %v345, %v344
    %v361 = vpack.c.b16 %v347, %v346
    %v362 = vpack.c.b16 %v349, %v348
    %v363 = vpack.c.b16 %v351, %v350
    %v364 = vpack.c.b16 %v353, %v352
    %v365 = vpack.c.b16 %v355, %v354
    %v366 = vpack.c.b16 %v357, %v356
    %v367 = vpack.c.b16 %v359, %v358
    %376 = vmatprep.subr.bf16.mxu0 0
    %377 = vmatpush1.bf16.msra.mxu0 %v360
    %378 = vmatprep.subr.bf16.mxu0 0
    %379 = vmatpush1.bf16.msra.mxu0 %v361
    %380 = vmatprep.subr.bf16.mxu0 0
    %381 = vmatpush1.bf16.msra.mxu0 %v362
    %382 = vmatprep.subr.bf16.mxu0 0
    %383 = vmatpush1.bf16.msra.mxu0 %v363
    %384 = vmatprep.subr.bf16.mxu0 0
    %385 = vmatpush1.bf16.msra.mxu0 %v364
    %386 = vmatprep.subr.bf16.mxu0 0
    %387 = vmatpush1.bf16.msra.mxu0 %v365
    %388 = vmatprep.subr.bf16.mxu0 0
    %389 = vmatpush1.bf16.msra.mxu0 %v366
    %390 = vmatprep.subr.bf16.mxu0 0
    %391 = vmatpush1.bf16.msra.mxu0 %v367
    %392 = vmatprep.subr.bf16.mxu0 0
    %393 = vmatpush1.bf16.msra.mxu0 0
    %394 = vmatprep.subr.bf16.mxu0 0
    %395 = vmatpush1.bf16.msra.mxu0 0
    %396 = vmatprep.subr.bf16.mxu0 0
    %397 = vmatpush1.bf16.msra.mxu0 0
    %398 = vmatprep.subr.bf16.mxu0 0
    %399 = vmatpush1.bf16.msra.mxu0 0
    %400 = vmatprep.subr.bf16.mxu0 0
    %401 = vmatpush1.bf16.msra.mxu0 0
    %402 = vmatprep.subr.bf16.mxu0 0
    %403 = vmatpush1.bf16.msra.mxu0 0
    %404 = vmatprep.subr.bf16.mxu0 0
    %405 = vmatpush1.bf16.msra.mxu0 0
    %406 = vmatprep.subr.bf16.mxu0 0
    %407 = vmatpush1.bf16.msra.mxu0 0
    %408 = vmatprep.mubr.bf16.mxu0 0
    %409 = vmatmul.mubr.bf16.gmra.mrb[0].mxu0 %v304
    %v410 = vpop.f32.mrb[0].mxu0
    %v411 = vadd.f32 %v326, %v410
    %v412 = vpop.f32.mrb[0].mxu0
    %v413 = vpop.f32.mrb[0].mxu0
    %v414 = vpop.f32.mrb[0].mxu0
    %415 = vdwg.mxu0
    %vm416 = vcmask 15360
    %417 = vst.msk [vmem:[%s7] sm:$0xff] %vm416, %v411
    // Predicated region
    $region34: #{tpu_custom_call.1} parent=1 // pred_check
      _
    $region35: #{tpu_custom_call.1} parent=1 // pred_check_branch
      %419 = sbr.rel (0) target = $region37
    $region36: #{tpu_custom_call.1} parent=1 // pred_region
      _
    $region37: #{tpu_custom_call.1} parent=1 // pred_fallthru
      _
    // Predicated region
    $region38: #{tpu_custom_call.1} parent=1 // pred_check
      _
    $region39: #{tpu_custom_call.1} parent=1 // pred_check_branch
      %421 = sbr.rel (0) target = $region41
    $region40: #{tpu_custom_call.1} parent=1 // pred_region
      _
    $region41: #{tpu_custom_call.1} parent=1 // pred_fallthru
      _
    %422 = vsyncpa [#allocation3], 1

</llo_original>
